<compile_context>
chip_gen: v7x
topology: tpu7x:2x2x1
jax: 0.10.0
libtpu: 0.0.40
codegen_flags: <defaults>
</compile_context>

<pallas_src>
import functools
import math

import jax
import jax.numpy as jnp
from jax import lax
from jax.experimental import pallas as pl
from jax.experimental.pallas import tpu as pltpu


def _round_up(x, m):
    return ((x + m - 1) // m) * m


def _pack_factor(e, target_lanes=512, max_lanes=2048):
    """Smallest K with K*E % 128 == 0, grown until K*E >= target_lanes."""
    base = math.lcm(e, 128) // e
    if base * e > max_lanes:
        return 1          # fall back: masked stores, still correct
    k = base
    while k * e < target_lanes and (k + base) * e <= max_lanes:
        k += base
    return k


# ----------------------------------------------------------------------------
# Kernels
# ----------------------------------------------------------------------------
def _encode_args(dt, w, phase, use_mxu):
    """z[r, i*E + m] = dt[r, i] * decay[m] + phase[m]  via MXU (or broadcast)."""
    if use_mxu:
        z = lax.dot_general(
            dt, w,
            dimension_numbers=(((1,), (0,)), ((), ())),
            precision=lax.Precision.HIGHEST,          # keep f32 accuracy on MXU
            preferred_element_type=jnp.float32)
    else:
        z = dt * w                                    # (TM,1) * (1,E) broadcast
    return z + phase


def _sincos_kernel(dt_ref, w_ref, phase_ref, o_ref, *, use_mxu):
    z = _encode_args(dt_ref[...], w_ref[...], phase_ref[...], use_mxu)
    o_ref[...] = jnp.sin(z).astype(o_ref.dtype)


def _sincos_plus_kernel(dt_ref, y_ref, w_ref, phase_ref, o_ref, *, use_mxu):
    dt = dt_ref[...]
    dy = jnp.abs(y_ref[...] - dt)                     # |y - dt| fused in-kernel
    w = w_ref[...]
    phase = phase_ref[...]
    z1 = _encode_args(dt, w, phase, use_mxu)
    z2 = _encode_args(dy, w, phase, use_mxu)
    o_ref[...] = (jnp.sin(z1) + jnp.sin(z2)).astype(o_ref.dtype)


# ----------------------------------------------------------------------------
# Module-equivalent wrapper
# ----------------------------------------------------------------------------
class SinCosEncoder:
    """JAX/Pallas port of the PyTorch SinCosEncoder module."""

    def __init__(self, encoding_dim, decay_rate=10000, interleave=True,
                 out_dtype=jnp.float32):
        assert encoding_dim % 2 == 0
        self.encoding_dim = encoding_dim
        self.decay_rate = decay_rate
        self.interleave = interleave
        self.out_dtype = jnp.dtype(out_dtype)   # bf16 halves HBM writeback if tolerated

        # Matches: torch.arange(0, D, 2) * (-log(decay_rate)/D), then exp.
        half = jnp.arange(0, encoding_dim, 2, dtype=jnp.float32)
        decay = jnp.exp(half * (-math.log(decay_rate) / encoding_dim))     # (D/2,)

        # Per-output-dim frequency + phase (0 -> sin lane, pi/2 -> cos lane),
        # so the kernel is a single fused  sin(dt * decay + phase).
        if interleave:
            decay_full = jnp.repeat(decay, 2)                              # (D,)
            phase = jnp.tile(jnp.array([0.0, math.pi / 2], jnp.float32),
                             encoding_dim // 2)                            # (D,)
        else:
            decay_full = jnp.concatenate([decay, decay])                   # (D,)
            phase = jnp.concatenate(
                [jnp.zeros(encoding_dim // 2, jnp.float32),
                 jnp.full((encoding_dim // 2,), math.pi / 2, jnp.float32)])

        # Lane packing factor: pack K dt values per output row so the output
        # last dim (K*E) is a multiple of 128 and >= 512 lanes -> unmasked,
        # lane-dense stores and less masked/lane-padded input DMA.
        k = _pack_factor(encoding_dim)
        self.pack = k
        lanes = k * encoding_dim

        # Block-diagonal decay matrix for the MXU widen+scale:
        #   W[i, i*E + m] = decay_full[m]
        eye = jnp.eye(k, dtype=jnp.float32)
        self.w = (eye[:, :, None] * decay_full[None, None, :]).reshape(k, lanes)
        self.phase_tiled = jnp.tile(phase, k).reshape(1, lanes)

    def _run(self, dt_flat, y_flat=None):
        """dt_flat, y_flat: (N,) float32 -> (N, encoding_dim) out_dtype."""
        e = self.encoding_dim
        k = self.pack
        lanes = k * e
        itemsize = self.out_dtype.itemsize
        row_unit = 16 if itemsize < 4 else 8          # bf16 needs (16,128) tiles
        n = dt_flat.shape[0]

        # Packed-row geometry: output buffer is (n_rows, K*E); its row-major
        # bytes are identical to (n_rows*K, E), so the final reshape is free.
        # Rows are padded only to the sublane unit (not to tile_m), so wasted
        # sin work is at most row_unit*K-1 elements.
        n_rows = _round_up(pl.cdiv(n, k), row_unit)
        n_pad = n_rows * k

        # Row-tile size: keep the double-buffered output tile ~2 MiB (safe on
        # v5e's 16 MiB scoped default, v6e/v7x 32 MiB), and use >=2 grid steps
        # whenever possible so both v7x TensorCores get work.
        cap_rows = max(row_unit,
                       min(1024, (2 * 1024 * 1024 // (lanes * itemsize))
                           // row_unit * row_unit))
        steps = pl.cdiv(n_rows, cap_rows)
        if n_rows >= 2 * row_unit:
            steps = max(steps, 2)
        tile_m = min(cap_rows, _round_up(pl.cdiv(n_rows, steps), row_unit))
        grid = (pl.cdiv(n_rows, tile_m),)             # last block may be partial

        def prep(v):
            if n_pad != n:
                v = jnp.pad(v, (0, n_pad - n))
            return v.reshape(n_rows, k)

        dt_p = prep(dt_flat)

        col_spec = pl.BlockSpec((tile_m, k), lambda i: (i, 0))
        w_spec = pl.BlockSpec((k, lanes), lambda i: (0, 0))
        ph_spec = pl.BlockSpec((1, lanes), lambda i: (0, 0))
        out_spec = pl.BlockSpec((tile_m, lanes), lambda i: (i, 0))
        out_shape = jax.ShapeDtypeStruct((n_rows, lanes), self.out_dtype)

        two = y_flat is not None
        n_sin = (2 if two else 1) * n_pad * e
        cost = pl.CostEstimate(
            flops=6 * n_sin,
            transcendentals=n_sin,
            bytes_accessed=n_pad * e * itemsize + (3 if two else 2) * n_pad * 4,
        )
        cparams = pltpu.CompilerParams(
            dimension_semantics=("parallel",),
            vmem_limit_bytes=32 * 1024 * 1024,        # explicit: safe on v5e/v6e/v7x
        )
        use_mxu = k > 1

        if not two:
            out = pl.pallas_call(
                functools.partial(_sincos_kernel, use_mxu=use_mxu),
                out_shape=out_shape,
                grid=grid,
                in_specs=[col_spec, w_spec, ph_spec],
                out_specs=out_spec,
                compiler_params=cparams,
                cost_estimate=cost,
            )(dt_p, self.w, self.phase_tiled)
        else:
            y_p = prep(y_flat)
            out = pl.pallas_call(
                functools.partial(_sincos_plus_kernel, use_mxu=use_mxu),
                out_shape=out_shape,
                grid=grid,
                in_specs=[col_spec, col_spec, w_spec, ph_spec],
                out_specs=out_spec,
                compiler_params=cparams,
                cost_estimate=cost,
            )(dt_p, y_p, self.w, self.phase_tiled)

        # Free reshape (identical row-major bytes); slice only if we padded.
        out = out.reshape(n_pad, e)
        if n_pad != n:
            out = out[:n]
        return out

    def __call__(self, dt, y=None):
        dt = jnp.asarray(dt, jnp.float32)
        shape = dt.shape
        dt_flat = dt.reshape(-1)
        if y is None:
            enc = self._run(dt_flat)
        else:
            y_flat = jnp.asarray(y, jnp.float32).reshape(-1)
            enc = self._run(dt_flat, y_flat)
        return enc.reshape(*shape, self.encoding_dim)


# ----------------------------------------------------------------------------
# Pure-JAX reference (mirrors the PyTorch code) for a correctness check.
# ----------------------------------------------------------------------------
def _ref_sin_cos_encoding(dt, encoding_dim, decay_rate, interleave):
    shape = dt.shape
    dt = dt.reshape(-1, 1)
    half = jnp.arange(0, encoding_dim, 2, dtype=jnp.float32)
    decay = jnp.exp(half * (-math.log(decay_rate) / encoding_dim))
    s = jnp.sin(dt * decay)
    c = jnp.cos(dt * decay)
    if interleave:
        enc = jnp.stack([s, c], axis=-1).reshape(dt.shape[0], encoding_dim)
    else:
        enc = jnp.concatenate([s, c], axis=-1)
    return enc.reshape(*shape, encoding_dim)


def _ref_forward(dt, y, encoding_dim, decay_rate, interleave):
    x = _ref_sin_cos_encoding(dt, encoding_dim, decay_rate, interleave)
    if y is not None:
        x = x + _ref_sin_cos_encoding(jnp.abs(y - dt), encoding_dim,
                                      decay_rate, interleave)
    return x


# ----------------------------------------------------------------------------
# Main
# ----------------------------------------------------------------------------
if __name__ == "__main__":
    encoding_dim = 64
    key = jax.random.PRNGKey(0)
    k1, k2, k3, k4 = jax.random.split(key, 4)

    # Small shapes consistent with the module: batch=2, seq=8.
    dt = jax.random.uniform(k1, (2, 8), jnp.float32) * 100.0
    y = jax.random.uniform(k2, (2, 8), jnp.float32) * 100.0

    encoder = SinCosEncoder(encoding_dim=encoding_dim, decay_rate=10000,
                            interleave=True)

    # forward(dt)
    out1 = jax.block_until_ready(encoder(dt))
    ref1 = _ref_forward(dt, None, encoding_dim, 10000, True)
    assert out1.shape == (2, 8, encoding_dim)
    assert jnp.allclose(out1, ref1, atol=1e-4, rtol=1e-4)

    # forward(dt, y)
    out2 = jax.block_until_ready(encoder(dt, y))
    ref2 = _ref_forward(dt, y, encoding_dim, 10000, True)
    assert out2.shape == (2, 8, encoding_dim)
    assert jnp.allclose(out2, ref2, atol=1e-4, rtol=1e-4)

    # Non-interleaved variant.
    encoder_ni = SinCosEncoder(encoding_dim=encoding_dim, decay_rate=10000,
                               interleave=False)
    out3 = jax.block_until_ready(encoder_ni(dt))
    ref3 = _ref_forward(dt, None, encoding_dim, 10000, False)
    assert jnp.allclose(out3, ref3, atol=1e-4, rtol=1e-4)

    # Ragged shape: exercises the partial last grid block and the pack-padding slice.
    dt_r = jax.random.uniform(k3, (5, 77), jnp.float32) * 100.0
    y_r = jax.random.uniform(k4, (5, 77), jnp.float32) * 100.0
    out4 = jax.block_until_ready(encoder(dt_r, y_r))
    ref4 = _ref_forward(dt_r, y_r, encoding_dim, 10000, True)
    assert out4.shape == (5, 77, encoding_dim)
    assert jnp.allclose(out4, ref4, atol=1e-4, rtol=1e-4)

    # bf16 output option (halves the dominant HBM writeback stream).
    encoder_bf16 = SinCosEncoder(encoding_dim=encoding_dim, decay_rate=10000,
                                 interleave=True, out_dtype=jnp.bfloat16)
    out5 = jax.block_until_ready(encoder_bf16(dt))
    assert out5.dtype == jnp.bfloat16
    assert jnp.allclose(out5.astype(jnp.float32), ref1, atol=1e-2, rtol=1e-2)

    print("KERNEL_OK")
</pallas_src>

<mosaic_0001>
module attributes {stable_mosaic.version = 11 : i64} {
  func.func @_sincos_kernel(%arg0: i32, %arg1: memref<8x8xf32, #tpu.memory_space<vmem>>, %arg2: memref<8x512xf32, #tpu.memory_space<vmem>>, %arg3: memref<1x512xf32, #tpu.memory_space<vmem>>, %arg4: memref<8x512xf32, #tpu.memory_space<vmem>>) attributes {dimension_semantics = [#tpu.dimension_semantics<parallel>], iteration_bounds = array<i64: 1>, scalar_prefetch = 0 : i64, scratch_operands = 0 : i64, tpu.core_type = #tpu.core_type<tc>, window_params = [{transform_indices = @transform_0, window_bounds = array<i64: 8, 8>}, {pipeline_mode = #tpu.pipeline_mode<synchronous>, transform_indices = @transform_1, window_bounds = array<i64: 8, 512>}, {pipeline_mode = #tpu.pipeline_mode<synchronous>, transform_indices = @transform_2, window_bounds = array<i64: 1, 512>}, {transform_indices = @transform_3, window_bounds = array<i64: 8, 512>}]} {
    %c0 = arith.constant 0 : index
    %c0_0 = arith.constant 0 : index
    %0 = vector.load %arg1[%c0, %c0_0] : memref<8x8xf32, #tpu.memory_space<vmem>>, vector<8x8xf32>
    %c0_1 = arith.constant 0 : index
    %c0_2 = arith.constant 0 : index
    %1 = vector.load %arg2[%c0_1, %c0_2] : memref<8x512xf32, #tpu.memory_space<vmem>>, vector<8x512xf32>
    %c0_3 = arith.constant 0 : index
    %c0_4 = arith.constant 0 : index
    %2 = vector.load %arg3[%c0_3, %c0_4] : memref<1x512xf32, #tpu.memory_space<vmem>>, vector<1x512xf32>
    %cst = arith.constant dense<0.000000e+00> : vector<8x512xf32>
    %3 = tpu.matmul %0, %1, %cst {dimension_numbers = #tpu.dot_dimension_numbers<[1], [0], [0], [1], [0, 0, 1, 1], [], []>, precision = #tpu.contract_precision<fp32>} : vector<8x8xf32>, vector<8x512xf32>, vector<8x512xf32> -> vector<8x512xf32>
    %4 = vector.broadcast %2 : vector<1x512xf32> to vector<8x512xf32>
    %5 = arith.addf %3, %4 : vector<8x512xf32>
    %6 = math.sin %5 : vector<8x512xf32>
    %c0_5 = arith.constant 0 : index
    %c0_6 = arith.constant 0 : index
    %7 = vector.load %arg4[%c0_5, %c0_6] : memref<8x512xf32, #tpu.memory_space<vmem>>, vector<8x512xf32>
    tpu.vector_store %arg4[%c0_5, %c0_6], %6 {strides = array<i32>} : memref<8x512xf32, #tpu.memory_space<vmem>>, vector<8x512xf32>,
    return
  }
  func.func @transform_0(%arg0: i32) -> (i32, i32) {
    %c0_i32 = arith.constant 0 : i32
    %c0_i32_0 = arith.constant 0 : i32
    return %arg0, %c0_i32 : i32, i32
  }
  func.func @transform_1(%arg0: i32) -> (i32, i32) {
    %c0_i32 = arith.constant 0 : i32
    %c0_i32_0 = arith.constant 0 : i32
    %c0_i32_1 = arith.constant 0 : i32
    return %c0_i32, %c0_i32_0 : i32, i32
  }
  func.func @transform_2(%arg0: i32) -> (i32, i32) {
    %c0_i32 = arith.constant 0 : i32
    %c0_i32_0 = arith.constant 0 : i32
    %c0_i32_1 = arith.constant 0 : i32
    return %c0_i32, %c0_i32_0 : i32, i32
  }
  func.func @transform_3(%arg0: i32) -> (i32, i32) {
    %c0_i32 = arith.constant 0 : i32
    %c0_i32_0 = arith.constant 0 : i32
    return %arg0, %c0_i32 : i32, i32
  }
}

</mosaic_0001>

<llo_original>
// kernel: tpu_custom_call.1
$region0: #{tpu_custom_call.1}
  #allocation0 [shape = 'u32[]', space=smem, size = 0x4, offset = 0x4, fixed_abs, tag = 'smem constant byte address 0x4 - core index']
  #allocation1 [shape = 'u32[144,128]{1,0:T(1,128)}', space=vmem, size = 0x12000, scoped, tag = 'internal scratch']
  %s0 = inlined_call_operand.hbm [shape: f32[8,8], index: 0, kind: input, shape index: {}]
  %s1 = inlined_call_operand.hbm [shape: f32[8,512], index: 1, kind: input, shape index: {}]
  %s2 = inlined_call_operand.vmem [shape: f32[1,512], index: 2, kind: input, shape index: {}]
  %s3 = inlined_call_operand.hbm [shape: f32[8,512], index: 3, kind: output, shape index: {}]
  %s4 = sld [smem:[#allocation0]]
  $region30: #{tpu_custom_call.1} parent=0
    _
  %s6 = ssub.s32 1, %s4
  %s7 = scalar_select 0, %s6, %s4
  $region1: #{tpu_custom_call.1} parent=0
    #allocation2 [shape = 'u8[4096]{0}', space=vmem, size = 0x1000, scoped, tag = 'input window, operand 0, single buffered']
    #allocation3 [shape = 's32[1]{0}', space=sflag, size = 0x4, scoped, tag = 'scoped memory for tpu_custom_call.1']
    #allocation4 [shape = 's32[1]{0}', space=sflag, size = 0x4, scoped, tag = 'scoped memory for tpu_custom_call.1']
    #allocation5 [shape = 'u8[16384]{0}', space=vmem, size = 0x4000, scoped, tag = 'input window, operand 1, single buffered']
    #allocation6 [shape = 's32[1]{0}', space=sflag, size = 0x4, scoped, tag = 'scoped memory for tpu_custom_call.1']
    #allocation7 [shape = 'u8[16384]{0}', space=vmem, size = 0x4000, scoped, tag = 'output window, operand 0, single buffered']
    %8 = vsyncpa [#allocation3], 0
    %9 = vsyncpa [#allocation6], 0
    %10 = vsyncpa [#allocation4], 0
    // Predicated region
    $region2: #{tpu_custom_call.1} parent=1 // pred_check
      _
    $region3: #{tpu_custom_call.1} parent=1 // pred_check_branch
      %12 = sbr.rel (0) target = $region5
    $region4: #{tpu_custom_call.1} parent=1 // pred_region
      %s14 = ssub.s32 128, 128
      %15 = vsyncadd [#allocation3], %s14
      %s17 = sshll.u32 [#allocation2], 4
      %s18 = int_to_ptr.vmem [resolvable:$true] %s17
      %20 = dma.hbm_to_vmem [thread:$0]  %s0, 128, %s18, [#allocation3]
    $region5: #{tpu_custom_call.1} parent=1 // pred_fallthru
      _
    // Predicated region
    $region6: #{tpu_custom_call.1} parent=1 // pred_check
      _
    $region7: #{tpu_custom_call.1} parent=1 // pred_check_branch
      %22 = sbr.rel (0) target = $region9
    $region8: #{tpu_custom_call.1} parent=1 // pred_region
      %s24 = ssub.s32 512, 512
      %25 = vsyncadd [#allocation6], %s24
      %s27 = sshll.u32 [#allocation5], 4
      %s28 = int_to_ptr.vmem [resolvable:$true] %s27
      %30 = dma.hbm_to_vmem [thread:$0]  %s1, 512, %s28, [#allocation6]
    $region9: #{tpu_custom_call.1} parent=1 // pred_fallthru
      _
    // Predicated region
    $region10: #{tpu_custom_call.1} parent=1 // pred_check
      _
    $region11: #{tpu_custom_call.1} parent=1 // pred_check_branch
      %32 = sbr.rel (0) target = $region13
    $region12: #{tpu_custom_call.1} parent=1 // pred_region
      _
    $region13: #{tpu_custom_call.1} parent=1 // pred_fallthru
      _
    // Predicated region
    $region14: #{tpu_custom_call.1} parent=1 // pred_check
      _
    $region15: #{tpu_custom_call.1} parent=1 // pred_check_branch
      %34 = sbr.rel (0) target = $region17
    $region16: #{tpu_custom_call.1} parent=1 // pred_region
      %35 = dma.done [#allocation3], 128
    $region17: #{tpu_custom_call.1} parent=1 // pred_fallthru
      _
    // Predicated region
    $region18: #{tpu_custom_call.1} parent=1 // pred_check
      _
    $region19: #{tpu_custom_call.1} parent=1 // pred_check_branch
      %37 = sbr.rel (0) target = $region21
    $region20: #{tpu_custom_call.1} parent=1 // pred_region
      %38 = dma.done [#allocation6], 512
    $region21: #{tpu_custom_call.1} parent=1 // pred_fallthru
      _
    %v39 = vld [vmem:[#allocation2] sm:$0xff]
    %v40 = vld [vmem:[#allocation5] sm:$0xff]
    %v41 = vld [vmem:[#allocation5 + $0x8] sm:$0xff]
    %v42 = vld [vmem:[#allocation5 + $0x10] sm:$0xff]
    %v43 = vld [vmem:[#allocation5 + $0x18] sm:$0xff]
    %v44 = vld [vmem:[%s2] sm:$0xf]
    %v46 = vlaneseq
    %v47 = vshrl.u32 %v46, 7
    %v48 = vsub.s32 0, %v47
    %v49 = vrot.slane %v44, %v48
    %v50 = vlaneseq
    %v51 = vshrl.u32 %v50, 7
    %v52 = vsub.s32 1, %v51
    %v53 = vrot.slane %v44, %v52
    %v54 = vlaneseq
    %v55 = vshrl.u32 %v54, 7
    %v56 = vsub.s32 2, %v55
    %v57 = vrot.slane %v44, %v56
    %v58 = vlaneseq
    %v59 = vshrl.u32 %v58, 7
    %v60 = vsub.s32 3, %v59
    %v61 = vrot.slane %v44, %v60
    %vm66 = vcmask 64512
    %v68 = vsel %vm66, %v39, 0
    %v70 = vand.u32 %v41, 4294901760
    %71 = vmatprep.subr.mxu0 %v70
    %v72 = vand.u32 %v40, 4294901760
    %73 = vmatpush1.msra.mxu0 %v72
    %74 = vmatprep.subr.mxu0 0.0
    %75 = vmatpush1.msra.mxu0 0.0
    %76 = vmatprep.subr.mxu0 0.0
    %77 = vmatpush1.msra.mxu0 0.0
    %78 = vmatprep.subr.mxu0 0.0
    %79 = vmatpush1.msra.mxu0 0.0
    %80 = vmatprep.subr.mxu0 0.0
    %81 = vmatpush1.msra.mxu0 0.0
    %82 = vmatprep.subr.mxu0 0.0
    %83 = vmatpush1.msra.mxu0 0.0
    %84 = vmatprep.subr.mxu0 0.0
    %85 = vmatpush1.msra.mxu0 0.0
    %86 = vmatprep.subr.mxu0 0.0
    %87 = vmatpush1.msra.mxu0 0.0
    %88 = vmatprep.subr.mxu0 0.0
    %89 = vmatpush1.msra.mxu0 0.0
    %90 = vmatprep.subr.mxu0 0.0
    %91 = vmatpush1.msra.mxu0 0.0
    %92 = vmatprep.subr.mxu0 0.0
    %93 = vmatpush1.msra.mxu0 0.0
    %94 = vmatprep.subr.mxu0 0.0
    %95 = vmatpush1.msra.mxu0 0.0
    %96 = vmatprep.subr.mxu0 0.0
    %97 = vmatpush1.msra.mxu0 0.0
    %98 = vmatprep.subr.mxu0 0.0
    %99 = vmatpush1.msra.mxu0 0.0
    %100 = vmatprep.subr.mxu0 0.0
    %101 = vmatpush1.msra.mxu0 0.0
    %102 = vmatprep.subr.mxu0 0.0
    %103 = vmatpush1.msra.mxu0 0.0
    %104 = vmatprep.subr.mxu0 0.0
    %105 = vmatpush1.msra.mxu0 0.0
    %106 = vmatprep.subr.mxu0 0.0
    %107 = vmatpush1.msra.mxu0 0.0
    %108 = vmatprep.subr.mxu0 0.0
    %109 = vmatpush1.msra.mxu0 0.0
    %110 = vmatprep.subr.mxu0 0.0
    %111 = vmatpush1.msra.mxu0 0.0
    %112 = vmatprep.subr.mxu0 0.0
    %113 = vmatpush1.msra.mxu0 0.0
    %114 = vmatprep.subr.mxu0 0.0
    %115 = vmatpush1.msra.mxu0 0.0
    %116 = vmatprep.subr.mxu0 0.0
    %117 = vmatpush1.msra.mxu0 0.0
    %118 = vmatprep.subr.mxu0 0.0
    %119 = vmatpush1.msra.mxu0 0.0
    %120 = vmatprep.subr.mxu0 0.0
    %121 = vmatpush1.msra.mxu0 0.0
    %122 = vmatprep.subr.mxu0 0.0
    %123 = vmatpush1.msra.mxu0 0.0
    %124 = vmatprep.subr.mxu0 0.0
    %125 = vmatpush1.msra.mxu0 0.0
    %126 = vmatprep.subr.mxu0 0.0
    %127 = vmatpush1.msra.mxu0 0.0
    %128 = vmatprep.subr.mxu0 0.0
    %129 = vmatpush1.msra.mxu0 0.0
    %130 = vmatprep.subr.mxu0 0.0
    %131 = vmatpush1.msra.mxu0 0.0
    %132 = vmatprep.subr.mxu0 0.0
    %133 = vmatpush1.msra.mxu0 0.0
    %134 = vmatprep.subr.mxu0 0.0
    %135 = vmatpush1.msra.mxu0 0.0
    %136 = vmatprep.mubr.f32.mxu0 0.0
    %v137 = vand.u32 %v68, 4294901760
    %v138 = vsub.f32 %v68, %v137
    %v139 = vand.u32 %v138, 4294901760
    %v140 = vsub.f32 %v138, %v139
    %v141 = vand.u32 %v140, 4294901760
    %142 = vmatmul.mubr.f32.gmra.mrb[0].mxu0 %v141
    %v143 = vpop.f32.mrb[0].mxu0
    %v144 = vadd.f32 %v49, %v143
    %v145 = vpop.f32.mrb[0].mxu0
    %v146 = vadd.f32 %v53, %v145
    %147 = vdwg.mxu0
    %v148 = vand.u32 %v41, 4294901760
    %v149 = vsub.f32 %v41, %v148
    %v150 = vand.u32 %v149, 4294901760
    %v151 = vsub.f32 %v149, %v150
    %v152 = vand.u32 %v151, 4294901760
    %153 = vmatprep.subr.mxu0 %v152
    %v154 = vand.u32 %v40, 4294901760
    %v155 = vsub.f32 %v40, %v154
    %v156 = vand.u32 %v155, 4294901760
    %v157 = vsub.f32 %v155, %v156
    %v158 = vand.u32 %v157, 4294901760
    %159 = vmatpush1.msra.mxu0 %v158
    %160 = vmatprep.subr.mxu0 0.0
    %161 = vmatpush1.msra.mxu0 0.0
    %162 = vmatprep.subr.mxu0 0.0
    %163 = vmatpush1.msra.mxu0 0.0
    %164 = vmatprep.subr.mxu0 0.0
    %165 = vmatpush1.msra.mxu0 0.0
    %166 = vmatprep.subr.mxu0 0.0
    %167 = vmatpush1.msra.mxu0 0.0
    %168 = vmatprep.subr.mxu0 0.0
    %169 = vmatpush1.msra.mxu0 0.0
    %170 = vmatprep.subr.mxu0 0.0
    %171 = vmatpush1.msra.mxu0 0.0
    %172 = vmatprep.subr.mxu0 0.0
    %173 = vmatpush1.msra.mxu0 0.0
    %174 = vmatprep.subr.mxu0 0.0
    %175 = vmatpush1.msra.mxu0 0.0
    %176 = vmatprep.subr.mxu0 0.0
    %177 = vmatpush1.msra.mxu0 0.0
    %178 = vmatprep.subr.mxu0 0.0
    %179 = vmatpush1.msra.mxu0 0.0
    %180 = vmatprep.subr.mxu0 0.0
    %181 = vmatpush1.msra.mxu0 0.0
    %182 = vmatprep.subr.mxu0 0.0
    %183 = vmatpush1.msra.mxu0 0.0
    %184 = vmatprep.subr.mxu0 0.0
    %185 = vmatpush1.msra.mxu0 0.0
    %186 = vmatprep.subr.mxu0 0.0
    %187 = vmatpush1.msra.mxu0 0.0
    %188 = vmatprep.subr.mxu0 0.0
    %189 = vmatpush1.msra.mxu0 0.0
    %190 = vmatprep.subr.mxu0 0.0
    %191 = vmatpush1.msra.mxu0 0.0
    %192 = vmatprep.subr.mxu0 0.0
    %193 = vmatpush1.msra.mxu0 0.0
    %194 = vmatprep.subr.mxu0 0.0
    %195 = vmatpush1.msra.mxu0 0.0
    %196 = vmatprep.subr.mxu0 0.0
    %197 = vmatpush1.msra.mxu0 0.0
    %198 = vmatprep.subr.mxu0 0.0
    %199 = vmatpush1.msra.mxu0 0.0
    %200 = vmatprep.subr.mxu0 0.0
    %201 = vmatpush1.msra.mxu0 0.0
    %202 = vmatprep.subr.mxu0 0.0
    %203 = vmatpush1.msra.mxu0 0.0
    %204 = vmatprep.subr.mxu0 0.0
    %205 = vmatpush1.msra.mxu0 0.0
    %206 = vmatprep.subr.mxu0 0.0
    %207 = vmatpush1.msra.mxu0 0.0
    %208 = vmatprep.subr.mxu0 0.0
    %209 = vmatpush1.msra.mxu0 0.0
    %210 = vmatprep.subr.mxu0 0.0
    %211 = vmatpush1.msra.mxu0 0.0
    %212 = vmatprep.subr.mxu0 0.0
    %213 = vmatpush1.msra.mxu0 0.0
    %214 = vmatprep.subr.mxu0 0.0
    %215 = vmatpush1.msra.mxu0 0.0
    %216 = vmatprep.subr.mxu0 0.0
    %217 = vmatpush1.msra.mxu0 0.0
    %218 = vmatprep.subr.mxu0 0.0
    %219 = vmatpush1.msra.mxu0 0.0
    %220 = vmatprep.subr.mxu0 0.0
    %221 = vmatpush1.msra.mxu0 0.0
    %222 = vmatprep.mubr.f32.mxu0 0.0
    %v223 = vand.u32 %v68, 4294901760
    %224 = vmatmul.mubr.f32.gmra.mrb[0].mxu0 %v223
    %v225 = vpop.f32.mrb[0].mxu0
    %v226 = vadd.f32 %v144, %v225
    %v227 = vpop.f32.mrb[0].mxu0
    %v228 = vadd.f32 %v146, %v227
    %229 = vdwg.mxu0
    %v230 = vand.u32 %v41, 4294901760
    %v231 = vsub.f32 %v41, %v230
    %232 = vmatprep.subr.mxu0 %v231
    %v233 = vand.u32 %v40, 4294901760
    %v234 = vsub.f32 %v40, %v233
    %235 = vmatpush1.msra.mxu0 %v234
    %236 = vmatprep.subr.mxu0 0.0
    %237 = vmatpush1.msra.mxu0 0.0
    %238 = vmatprep.subr.mxu0 0.0
    %239 = vmatpush1.msra.mxu0 0.0
    %240 = vmatprep.subr.mxu0 0.0
    %241 = vmatpush1.msra.mxu0 0.0
    %242 = vmatprep.subr.mxu0 0.0
    %243 = vmatpush1.msra.mxu0 0.0
    %244 = vmatprep.subr.mxu0 0.0
    %245 = vmatpush1.msra.mxu0 0.0
    %246 = vmatprep.subr.mxu0 0.0
    %247 = vmatpush1.msra.mxu0 0.0
    %248 = vmatprep.subr.mxu0 0.0
    %249 = vmatpush1.msra.mxu0 0.0
    %250 = vmatprep.subr.mxu0 0.0
    %251 = vmatpush1.msra.mxu0 0.0
    %252 = vmatprep.subr.mxu0 0.0
    %253 = vmatpush1.msra.mxu0 0.0
    %254 = vmatprep.subr.mxu0 0.0
    %255 = vmatpush1.msra.mxu0 0.0
    %256 = vmatprep.subr.mxu0 0.0
    %257 = vmatpush1.msra.mxu0 0.0
    %258 = vmatprep.subr.mxu0 0.0
    %259 = vmatpush1.msra.mxu0 0.0
    %260 = vmatprep.subr.mxu0 0.0
    %261 = vmatpush1.msra.mxu0 0.0
    %262 = vmatprep.subr.mxu0 0.0
    %263 = vmatpush1.msra.mxu0 0.0
    %264 = vmatprep.subr.mxu0 0.0
    %265 = vmatpush1.msra.mxu0 0.0
    %266 = vmatprep.subr.mxu0 0.0
    %267 = vmatpush1.msra.mxu0 0.0
    %268 = vmatprep.subr.mxu0 0.0
    %269 = vmatpush1.msra.mxu0 0.0
    %270 = vmatprep.subr.mxu0 0.0
    %271 = vmatpush1.msra.mxu0 0.0
    %272 = vmatprep.subr.mxu0 0.0
    %273 = vmatpush1.msra.mxu0 0.0
    %274 = vmatprep.subr.mxu0 0.0
    %275 = vmatpush1.msra.mxu0 0.0
    %276 = vmatprep.subr.mxu0 0.0
    %277 = vmatpush1.msra.mxu0 0.0
    %278 = vmatprep.subr.mxu0 0.0
    %279 = vmatpush1.msra.mxu0 0.0
    %280 = vmatprep.subr.mxu0 0.0
    %281 = vmatpush1.msra.mxu0 0.0
    %282 = vmatprep.subr.mxu0 0.0
    %283 = vmatpush1.msra.mxu0 0.0
    %284 = vmatprep.subr.mxu0 0.0
    %285 = vmatpush1.msra.mxu0 0.0
    %286 = vmatprep.subr.mxu0 0.0
    %287 = vmatpush1.msra.mxu0 0.0
    %288 = vmatprep.subr.mxu0 0.0
    %289 = vmatpush1.msra.mxu0 0.0
    %290 = vmatprep.subr.mxu0 0.0
    %291 = vmatpush1.msra.mxu0 0.0
    %292 = vmatprep.subr.mxu0 0.0
    %293 = vmatpush1.msra.mxu0 0.0
    %294 = vmatprep.subr.mxu0 0.0
    %295 = vmatpush1.msra.mxu0 0.0
    %296 = vmatprep.subr.mxu0 0.0
    %297 = vmatpush1.msra.mxu0 0.0
    %298 = vmatprep.mubr.f32.mxu0 0.0
    %v299 = vand.u32 %v68, 4294901760
    %v300 = vsub.f32 %v68, %v299
    %301 = vmatmul.mubr.f32.gmra.mrb[0].mxu0 %v300
    %v302 = vpop.f32.mrb[0].mxu0
    %v303 = vadd.f32 %v226, %v302
    %v304 = vpop.f32.mrb[0].mxu0
    %v305 = vadd.f32 %v228, %v304
    %306 = vdwg.mxu0
    %v307 = vand.u32 %v41, 4294901760
    %308 = vmatprep.subr.mxu0 %v307
    %v309 = vand.u32 %v40, 4294901760
    %310 = vmatpush1.msra.mxu0 %v309
    %311 = vmatprep.subr.mxu0 0.0
    %312 = vmatpush1.msra.mxu0 0.0
    %313 = vmatprep.subr.mxu0 0.0
    %314 = vmatpush1.msra.mxu0 0.0
    %315 = vmatprep.subr.mxu0 0.0
    %316 = vmatpush1.msra.mxu0 0.0
    %317 = vmatprep.subr.mxu0 0.0
    %318 = vmatpush1.msra.mxu0 0.0
    %319 = vmatprep.subr.mxu0 0.0
    %320 = vmatpush1.msra.mxu0 0.0
    %321 = vmatprep.subr.mxu0 0.0
    %322 = vmatpush1.msra.mxu0 0.0
    %323 = vmatprep.subr.mxu0 0.0
    %324 = vmatpush1.msra.mxu0 0.0
    %325 = vmatprep.subr.mxu0 0.0
    %326 = vmatpush1.msra.mxu0 0.0
    %327 = vmatprep.subr.mxu0 0.0
    %328 = vmatpush1.msra.mxu0 0.0
    %329 = vmatprep.subr.mxu0 0.0
    %330 = vmatpush1.msra.mxu0 0.0
    %331 = vmatprep.subr.mxu0 0.0
    %332 = vmatpush1.msra.mxu0 0.0
    %333 = vmatprep.subr.mxu0 0.0
    %334 = vmatpush1.msra.mxu0 0.0
    %335 = vmatprep.subr.mxu0 0.0
    %336 = vmatpush1.msra.mxu0 0.0
    %337 = vmatprep.subr.mxu0 0.0
    %338 = vmatpush1.msra.mxu0 0.0
    %339 = vmatprep.subr.mxu0 0.0
    %340 = vmatpush1.msra.mxu0 0.0
    %341 = vmatprep.subr.mxu0 0.0
    %342 = vmatpush1.msra.mxu0 0.0
    %343 = vmatprep.subr.mxu0 0.0
    %344 = vmatpush1.msra.mxu0 0.0
    %345 = vmatprep.subr.mxu0 0.0
    %346 = vmatpush1.msra.mxu0 0.0
    %347 = vmatprep.subr.mxu0 0.0
    %348 = vmatpush1.msra.mxu0 0.0
    %349 = vmatprep.subr.mxu0 0.0
    %350 = vmatpush1.msra.mxu0 0.0
    %351 = vmatprep.subr.mxu0 0.0
    %352 = vmatpush1.msra.mxu0 0.0
    %353 = vmatprep.subr.mxu0 0.0
    %354 = vmatpush1.msra.mxu0 0.0
    %355 = vmatprep.subr.mxu0 0.0
    %356 = vmatpush1.msra.mxu0 0.0
    %357 = vmatprep.subr.mxu0 0.0
    %358 = vmatpush1.msra.mxu0 0.0
    %359 = vmatprep.subr.mxu0 0.0
    %360 = vmatpush1.msra.mxu0 0.0
    %361 = vmatprep.subr.mxu0 0.0
    %362 = vmatpush1.msra.mxu0 0.0
    %363 = vmatprep.subr.mxu0 0.0
    %364 = vmatpush1.msra.mxu0 0.0
    %365 = vmatprep.subr.mxu0 0.0
    %366 = vmatpush1.msra.mxu0 0.0
    %367 = vmatprep.subr.mxu0 0.0
    %368 = vmatpush1.msra.mxu0 0.0
    %369 = vmatprep.subr.mxu0 0.0
    %370 = vmatpush1.msra.mxu0 0.0
    %371 = vmatprep.subr.mxu0 0.0
    %372 = vmatpush1.msra.mxu0 0.0
    %373 = vmatprep.mubr.f32.mxu0 0.0
    %v374 = vand.u32 %v68, 4294901760
    %v375 = vsub.f32 %v68, %v374
    %v376 = vand.u32 %v375, 4294901760
    %377 = vmatmul.mubr.f32.gmra.mrb[0].mxu0 %v376
    %v378 = vpop.f32.mrb[0].mxu0
    %v379 = vadd.f32 %v303, %v378
    %v380 = vpop.f32.mrb[0].mxu0
    %v381 = vadd.f32 %v305, %v380
    %382 = vdwg.mxu0
    %v383 = vand.u32 %v41, 4294901760
    %v384 = vsub.f32 %v41, %v383
    %v385 = vand.u32 %v384, 4294901760
    %386 = vmatprep.subr.mxu0 %v385
    %v387 = vand.u32 %v40, 4294901760
    %v388 = vsub.f32 %v40, %v387
    %v389 = vand.u32 %v388, 4294901760
    %390 = vmatpush1.msra.mxu0 %v389
    %391 = vmatprep.subr.mxu0 0.0
    %392 = vmatpush1.msra.mxu0 0.0
    %393 = vmatprep.subr.mxu0 0.0
    %394 = vmatpush1.msra.mxu0 0.0
    %395 = vmatprep.subr.mxu0 0.0
    %396 = vmatpush1.msra.mxu0 0.0
    %397 = vmatprep.subr.mxu0 0.0
    %398 = vmatpush1.msra.mxu0 0.0
    %399 = vmatprep.subr.mxu0 0.0
    %400 = vmatpush1.msra.mxu0 0.0
    %401 = vmatprep.subr.mxu0 0.0
    %402 = vmatpush1.msra.mxu0 0.0
    %403 = vmatprep.subr.mxu0 0.0
    %404 = vmatpush1.msra.mxu0 0.0
    %405 = vmatprep.subr.mxu0 0.0
    %406 = vmatpush1.msra.mxu0 0.0
    %407 = vmatprep.subr.mxu0 0.0
    %408 = vmatpush1.msra.mxu0 0.0
    %409 = vmatprep.subr.mxu0 0.0
    %410 = vmatpush1.msra.mxu0 0.0
    %411 = vmatprep.subr.mxu0 0.0
    %412 = vmatpush1.msra.mxu0 0.0
    %413 = vmatprep.subr.mxu0 0.0
    %414 = vmatpush1.msra.mxu0 0.0
    %415 = vmatprep.subr.mxu0 0.0
    %416 = vmatpush1.msra.mxu0 0.0
    %417 = vmatprep.subr.mxu0 0.0
    %418 = vmatpush1.msra.mxu0 0.0
    %419 = vmatprep.subr.mxu0 0.0
    %420 = vmatpush1.msra.mxu0 0.0
    %421 = vmatprep.subr.mxu0 0.0
    %422 = vmatpush1.msra.mxu0 0.0
    %423 = vmatprep.subr.mxu0 0.0
    %424 = vmatpush1.msra.mxu0 0.0
    %425 = vmatprep.subr.mxu0 0.0
    %426 = vmatpush1.msra.mxu0 0.0
    %427 = vmatprep.subr.mxu0 0.0
    %428 = vmatpush1.msra.mxu0 0.0
    %429 = vmatprep.subr.mxu0 0.0
    %430 = vmatpush1.msra.mxu0 0.0
    %431 = vmatprep.subr.mxu0 0.0
    %432 = vmatpush1.msra.mxu0 0.0
    %433 = vmatprep.subr.mxu0 0.0
    %434 = vmatpush1.msra.mxu0 0.0
    %435 = vmatprep.subr.mxu0 0.0
    %436 = vmatpush1.msra.mxu0 0.0
    %437 = vmatprep.subr.mxu0 0.0
    %438 = vmatpush1.msra.mxu0 0.0
    %439 = vmatprep.subr.mxu0 0.0
    %440 = vmatpush1.msra.mxu0 0.0
    %441 = vmatprep.subr.mxu0 0.0
    %442 = vmatpush1.msra.mxu0 0.0
    %443 = vmatprep.subr.mxu0 0.0
    %444 = vmatpush1.msra.mxu0 0.0
    %445 = vmatprep.subr.mxu0 0.0
    %446 = vmatpush1.msra.mxu0 0.0
    %447 = vmatprep.subr.mxu0 0.0
    %448 = vmatpush1.msra.mxu0 0.0
    %449 = vmatprep.subr.mxu0 0.0
    %450 = vmatpush1.msra.mxu0 0.0
    %451 = vmatprep.subr.mxu0 0.0
    %452 = vmatpush1.msra.mxu0 0.0
    %453 = vmatprep.mubr.f32.mxu0 0.0
    %v454 = vand.u32 %v68, 4294901760
    %455 = vmatmul.mubr.f32.gmra.mrb[0].mxu0 %v454
    %v456 = vpop.f32.mrb[0].mxu0
    %v457 = vadd.f32 %v379, %v456
    %v458 = vpop.f32.mrb[0].mxu0
    %v459 = vadd.f32 %v381, %v458
    %460 = vdwg.mxu0
    %v461 = vand.u32 %v41, 4294901760
    %462 = vmatprep.subr.mxu0 %v461
    %v463 = vand.u32 %v40, 4294901760
    %464 = vmatpush1.msra.mxu0 %v463
    %465 = vmatprep.subr.mxu0 0.0
    %466 = vmatpush1.msra.mxu0 0.0
    %467 = vmatprep.subr.mxu0 0.0
    %468 = vmatpush1.msra.mxu0 0.0
    %469 = vmatprep.subr.mxu0 0.0
    %470 = vmatpush1.msra.mxu0 0.0
    %471 = vmatprep.subr.mxu0 0.0
    %472 = vmatpush1.msra.mxu0 0.0
    %473 = vmatprep.subr.mxu0 0.0
    %474 = vmatpush1.msra.mxu0 0.0
    %475 = vmatprep.subr.mxu0 0.0
    %476 = vmatpush1.msra.mxu0 0.0
    %477 = vmatprep.subr.mxu0 0.0
    %478 = vmatpush1.msra.mxu0 0.0
    %479 = vmatprep.subr.mxu0 0.0
    %480 = vmatpush1.msra.mxu0 0.0
    %481 = vmatprep.subr.mxu0 0.0
    %482 = vmatpush1.msra.mxu0 0.0
    %483 = vmatprep.subr.mxu0 0.0
    %484 = vmatpush1.msra.mxu0 0.0
    %485 = vmatprep.subr.mxu0 0.0
    %486 = vmatpush1.msra.mxu0 0.0
    %487 = vmatprep.subr.mxu0 0.0
    %488 = vmatpush1.msra.mxu0 0.0
    %489 = vmatprep.subr.mxu0 0.0
    %490 = vmatpush1.msra.mxu0 0.0
    %491 = vmatprep.subr.mxu0 0.0
    %492 = vmatpush1.msra.mxu0 0.0
    %493 = vmatprep.subr.mxu0 0.0
    %494 = vmatpush1.msra.mxu0 0.0
    %495 = vmatprep.subr.mxu0 0.0
    %496 = vmatpush1.msra.mxu0 0.0
    %497 = vmatprep.subr.mxu0 0.0
    %498 = vmatpush1.msra.mxu0 0.0
    %499 = vmatprep.subr.mxu0 0.0
    %500 = vmatpush1.msra.mxu0 0.0
    %501 = vmatprep.subr.mxu0 0.0
    %502 = vmatpush1.msra.mxu0 0.0
    %503 = vmatprep.subr.mxu0 0.0
    %504 = vmatpush1.msra.mxu0 0.0
    %505 = vmatprep.subr.mxu0 0.0
    %506 = vmatpush1.msra.mxu0 0.0
    %507 = vmatprep.subr.mxu0 0.0
    %508 = vmatpush1.msra.mxu0 0.0
    %509 = vmatprep.subr.mxu0 0.0
    %510 = vmatpush1.msra.mxu0 0.0
    %511 = vmatprep.subr.mxu0 0.0
    %512 = vmatpush1.msra.mxu0 0.0
    %513 = vmatprep.subr.mxu0 0.0
    %514 = vmatpush1.msra.mxu0 0.0
    %515 = vmatprep.subr.mxu0 0.0
    %516 = vmatpush1.msra.mxu0 0.0
    %517 = vmatprep.subr.mxu0 0.0
    %518 = vmatpush1.msra.mxu0 0.0
    %519 = vmatprep.subr.mxu0 0.0
    %520 = vmatpush1.msra.mxu0 0.0
    %521 = vmatprep.subr.mxu0 0.0
    %522 = vmatpush1.msra.mxu0 0.0
    %523 = vmatprep.subr.mxu0 0.0
    %524 = vmatpush1.msra.mxu0 0.0
    %525 = vmatprep.subr.mxu0 0.0
    %526 = vmatpush1.msra.mxu0 0.0
    %527 = vmatprep.mubr.f32.mxu0 0.0
    %v528 = vand.u32 %v68, 4294901760
    %529 = vmatmul.mubr.f32.gmra.mrb[0].mxu0 %v528
    %v530 = vpop.f32.mrb[0].mxu0
    %v531 = vadd.f32 %v457, %v530
    %v532 = vpop.f32.mrb[0].mxu0
    %v533 = vadd.f32 %v459, %v532
    %534 = vdwg.mxu0
    %v535 = vand.u32 %v43, 4294901760
    %536 = vmatprep.subr.mxu0 %v535
    %v537 = vand.u32 %v42, 4294901760
    %538 = vmatpush1.msra.mxu0 %v537
    %539 = vmatprep.subr.mxu0 0.0
    %540 = vmatpush1.msra.mxu0 0.0
    %541 = vmatprep.subr.mxu0 0.0
    %542 = vmatpush1.msra.mxu0 0.0
    %543 = vmatprep.subr.mxu0 0.0
    %544 = vmatpush1.msra.mxu0 0.0
    %545 = vmatprep.subr.mxu0 0.0
    %546 = vmatpush1.msra.mxu0 0.0
    %547 = vmatprep.subr.mxu0 0.0
    %548 = vmatpush1.msra.mxu0 0.0
    %549 = vmatprep.subr.mxu0 0.0
    %550 = vmatpush1.msra.mxu0 0.0
    %551 = vmatprep.subr.mxu0 0.0
    %552 = vmatpush1.msra.mxu0 0.0
    %553 = vmatprep.subr.mxu0 0.0
    %554 = vmatpush1.msra.mxu0 0.0
    %555 = vmatprep.subr.mxu0 0.0
    %556 = vmatpush1.msra.mxu0 0.0
    %557 = vmatprep.subr.mxu0 0.0
    %558 = vmatpush1.msra.mxu0 0.0
    %559 = vmatprep.subr.mxu0 0.0
    %560 = vmatpush1.msra.mxu0 0.0
    %561 = vmatprep.subr.mxu0 0.0
    %562 = vmatpush1.msra.mxu0 0.0
    %563 = vmatprep.subr.mxu0 0.0
    %564 = vmatpush1.msra.mxu0 0.0
    %565 = vmatprep.subr.mxu0 0.0
    %566 = vmatpush1.msra.mxu0 0.0
    %567 = vmatprep.subr.mxu0 0.0
    %568 = vmatpush1.msra.mxu0 0.0
    %569 = vmatprep.subr.mxu0 0.0
    %570 = vmatpush1.msra.mxu0 0.0
    %571 = vmatprep.subr.mxu0 0.0
    %572 = vmatpush1.msra.mxu0 0.0
    %573 = vmatprep.subr.mxu0 0.0
    %574 = vmatpush1.msra.mxu0 0.0
    %575 = vmatprep.subr.mxu0 0.0
    %576 = vmatpush1.msra.mxu0 0.0
    %577 = vmatprep.subr.mxu0 0.0
    %578 = vmatpush1.msra.mxu0 0.0
    %579 = vmatprep.subr.mxu0 0.0
    %580 = vmatpush1.msra.mxu0 0.0
    %581 = vmatprep.subr.mxu0 0.0
    %582 = vmatpush1.msra.mxu0 0.0
    %583 = vmatprep.subr.mxu0 0.0
    %584 = vmatpush1.msra.mxu0 0.0
    %585 = vmatprep.subr.mxu0 0.0
    %586 = vmatpush1.msra.mxu0 0.0
    %587 = vmatprep.subr.mxu0 0.0
    %588 = vmatpush1.msra.mxu0 0.0
    %589 = vmatprep.subr.mxu0 0.0
    %590 = vmatpush1.msra.mxu0 0.0
    %591 = vmatprep.subr.mxu0 0.0
    %592 = vmatpush1.msra.mxu0 0.0
    %593 = vmatprep.subr.mxu0 0.0
    %594 = vmatpush1.msra.mxu0 0.0
    %595 = vmatprep.subr.mxu0 0.0
    %596 = vmatpush1.msra.mxu0 0.0
    %597 = vmatprep.subr.mxu0 0.0
    %598 = vmatpush1.msra.mxu0 0.0
    %599 = vmatprep.subr.mxu0 0.0
    %600 = vmatpush1.msra.mxu0 0.0
    %601 = vmatprep.mubr.f32.mxu0 0.0
    %v602 = vand.u32 %v68, 4294901760
    %v603 = vsub.f32 %v68, %v602
    %v604 = vand.u32 %v603, 4294901760
    %v605 = vsub.f32 %v603, %v604
    %v606 = vand.u32 %v605, 4294901760
    %607 = vmatmul.mubr.f32.gmra.mrb[0].mxu0 %v606
    %v608 = vpop.f32.mrb[0].mxu0
    %v609 = vadd.f32 %v57, %v608
    %v610 = vpop.f32.mrb[0].mxu0
    %v611 = vadd.f32 %v61, %v610
    %612 = vdwg.mxu0
    %v613 = vand.u32 %v43, 4294901760
    %v614 = vsub.f32 %v43, %v613
    %v615 = vand.u32 %v614, 4294901760
    %v616 = vsub.f32 %v614, %v615
    %v617 = vand.u32 %v616, 4294901760
    %618 = vmatprep.subr.mxu0 %v617
    %v619 = vand.u32 %v42, 4294901760
    %v620 = vsub.f32 %v42, %v619
    %v621 = vand.u32 %v620, 4294901760
    %v622 = vsub.f32 %v620, %v621
    %v623 = vand.u32 %v622, 4294901760
    %624 = vmatpush1.msra.mxu0 %v623
    %625 = vmatprep.subr.mxu0 0.0
    %626 = vmatpush1.msra.mxu0 0.0
    %627 = vmatprep.subr.mxu0 0.0
    %628 = vmatpush1.msra.mxu0 0.0
    %629 = vmatprep.subr.mxu0 0.0
    %630 = vmatpush1.msra.mxu0 0.0
    %631 = vmatprep.subr.mxu0 0.0
    %632 = vmatpush1.msra.mxu0 0.0
    %633 = vmatprep.subr.mxu0 0.0
    %634 = vmatpush1.msra.mxu0 0.0
    %635 = vmatprep.subr.mxu0 0.0
    %636 = vmatpush1.msra.mxu0 0.0
    %637 = vmatprep.subr.mxu0 0.0
    %638 = vmatpush1.msra.mxu0 0.0
    %639 = vmatprep.subr.mxu0 0.0
    %640 = vmatpush1.msra.mxu0 0.0
    %641 = vmatprep.subr.mxu0 0.0
    %642 = vmatpush1.msra.mxu0 0.0
    %643 = vmatprep.subr.mxu0 0.0
    %644 = vmatpush1.msra.mxu0 0.0
    %645 = vmatprep.subr.mxu0 0.0
    %646 = vmatpush1.msra.mxu0 0.0
    %647 = vmatprep.subr.mxu0 0.0
    %648 = vmatpush1.msra.mxu0 0.0
    %649 = vmatprep.subr.mxu0 0.0
    %650 = vmatpush1.msra.mxu0 0.0
    %651 = vmatprep.subr.mxu0 0.0
    %652 = vmatpush1.msra.mxu0 0.0
    %653 = vmatprep.subr.mxu0 0.0
    %654 = vmatpush1.msra.mxu0 0.0
    %655 = vmatprep.subr.mxu0 0.0
    %656 = vmatpush1.msra.mxu0 0.0
    %657 = vmatprep.subr.mxu0 0.0
    %658 = vmatpush1.msra.mxu0 0.0
    %659 = vmatprep.subr.mxu0 0.0
    %660 = vmatpush1.msra.mxu0 0.0
    %661 = vmatprep.subr.mxu0 0.0
    %662 = vmatpush1.msra.mxu0 0.0
    %663 = vmatprep.subr.mxu0 0.0
    %664 = vmatpush1.msra.mxu0 0.0
    %665 = vmatprep.subr.mxu0 0.0
    %666 = vmatpush1.msra.mxu0 0.0
    %667 = vmatprep.subr.mxu0 0.0
    %668 = vmatpush1.msra.mxu0 0.0
    %669 = vmatprep.subr.mxu0 0.0
    %670 = vmatpush1.msra.mxu0 0.0
    %671 = vmatprep.subr.mxu0 0.0
    %672 = vmatpush1.msra.mxu0 0.0
    %673 = vmatprep.subr.mxu0 0.0
    %674 = vmatpush1.msra.mxu0 0.0
    %675 = vmatprep.subr.mxu0 0.0
    %676 = vmatpush1.msra.mxu0 0.0
    %677 = vmatprep.subr.mxu0 0.0
    %678 = vmatpush1.msra.mxu0 0.0
    %679 = vmatprep.subr.mxu0 0.0
    %680 = vmatpush1.msra.mxu0 0.0
    %681 = vmatprep.subr.mxu0 0.0
    %682 = vmatpush1.msra.mxu0 0.0
    %683 = vmatprep.subr.mxu0 0.0
    %684 = vmatpush1.msra.mxu0 0.0
    %685 = vmatprep.subr.mxu0 0.0
    %686 = vmatpush1.msra.mxu0 0.0
    %687 = vmatprep.mubr.f32.mxu0 0.0
    %v688 = vand.u32 %v68, 4294901760
    %689 = vmatmul.mubr.f32.gmra.mrb[0].mxu0 %v688
    %v690 = vpop.f32.mrb[0].mxu0
    %v691 = vadd.f32 %v609, %v690
    %v692 = vpop.f32.mrb[0].mxu0
    %v693 = vadd.f32 %v611, %v692
    %694 = vdwg.mxu0
    %v695 = vand.u32 %v43, 4294901760
    %v696 = vsub.f32 %v43, %v695
    %697 = vmatprep.subr.mxu0 %v696
    %v698 = vand.u32 %v42, 4294901760
    %v699 = vsub.f32 %v42, %v698
    %700 = vmatpush1.msra.mxu0 %v699
    %701 = vmatprep.subr.mxu0 0.0
    %702 = vmatpush1.msra.mxu0 0.0
    %703 = vmatprep.subr.mxu0 0.0
    %704 = vmatpush1.msra.mxu0 0.0
    %705 = vmatprep.subr.mxu0 0.0
    %706 = vmatpush1.msra.mxu0 0.0
    %707 = vmatprep.subr.mxu0 0.0
    %708 = vmatpush1.msra.mxu0 0.0
    %709 = vmatprep.subr.mxu0 0.0
    %710 = vmatpush1.msra.mxu0 0.0
    %711 = vmatprep.subr.mxu0 0.0
    %712 = vmatpush1.msra.mxu0 0.0
    %713 = vmatprep.subr.mxu0 0.0
    %714 = vmatpush1.msra.mxu0 0.0
    %715 = vmatprep.subr.mxu0 0.0
    %716 = vmatpush1.msra.mxu0 0.0
    %717 = vmatprep.subr.mxu0 0.0
    %718 = vmatpush1.msra.mxu0 0.0
    %719 = vmatprep.subr.mxu0 0.0
    %720 = vmatpush1.msra.mxu0 0.0
    %721 = vmatprep.subr.mxu0 0.0
    %722 = vmatpush1.msra.mxu0 0.0
    %723 = vmatprep.subr.mxu0 0.0
    %724 = vmatpush1.msra.mxu0 0.0
    %725 = vmatprep.subr.mxu0 0.0
    %726 = vmatpush1.msra.mxu0 0.0
    %727 = vmatprep.subr.mxu0 0.0
    %728 = vmatpush1.msra.mxu0 0.0
    %729 = vmatprep.subr.mxu0 0.0
    %730 = vmatpush1.msra.mxu0 0.0
    %731 = vmatprep.subr.mxu0 0.0
    %732 = vmatpush1.msra.mxu0 0.0
    %733 = vmatprep.subr.mxu0 0.0
    %734 = vmatpush1.msra.mxu0 0.0
    %735 = vmatprep.subr.mxu0 0.0
    %736 = vmatpush1.msra.mxu0 0.0
    %737 = vmatprep.subr.mxu0 0.0
    %738 = vmatpush1.msra.mxu0 0.0
    %739 = vmatprep.subr.mxu0 0.0
    %740 = vmatpush1.msra.mxu0 0.0
    %741 = vmatprep.subr.mxu0 0.0
    %742 = vmatpush1.msra.mxu0 0.0
    %743 = vmatprep.subr.mxu0 0.0
    %744 = vmatpush1.msra.mxu0 0.0
    %745 = vmatprep.subr.mxu0 0.0
    %746 = vmatpush1.msra.mxu0 0.0
    %747 = vmatprep.subr.mxu0 0.0
    %748 = vmatpush1.msra.mxu0 0.0
    %749 = vmatprep.subr.mxu0 0.0
    %750 = vmatpush1.msra.mxu0 0.0
    %751 = vmatprep.subr.mxu0 0.0
    %752 = vmatpush1.msra.mxu0 0.0
    %753 = vmatprep.subr.mxu0 0.0
    %754 = vmatpush1.msra.mxu0 0.0
    %755 = vmatprep.subr.mxu0 0.0
    %756 = vmatpush1.msra.mxu0 0.0
    %757 = vmatprep.subr.mxu0 0.0
    %758 = vmatpush1.msra.mxu0 0.0
    %759 = vmatprep.subr.mxu0 0.0
    %760 = vmatpush1.msra.mxu0 0.0
    %761 = vmatprep.subr.mxu0 0.0
    %762 = vmatpush1.msra.mxu0 0.0
    %763 = vmatprep.mubr.f32.mxu0 0.0
    %v764 = vand.u32 %v68, 4294901760
    %v765 = vsub.f32 %v68, %v764
    %766 = vmatmul.mubr.f32.gmra.mrb[0].mxu0 %v765
    %v767 = vpop.f32.mrb[0].mxu0
    %v768 = vadd.f32 %v691, %v767
    %v769 = vpop.f32.mrb[0].mxu0
    %v770 = vadd.f32 %v693, %v769
    %771 = vdwg.mxu0
    %v772 = vand.u32 %v43, 4294901760
    %773 = vmatprep.subr.mxu0 %v772
    %v774 = vand.u32 %v42, 4294901760
    %775 = vmatpush1.msra.mxu0 %v774
    %776 = vmatprep.subr.mxu0 0.0
    %777 = vmatpush1.msra.mxu0 0.0
    %778 = vmatprep.subr.mxu0 0.0
    %779 = vmatpush1.msra.mxu0 0.0
    %780 = vmatprep.subr.mxu0 0.0
    %781 = vmatpush1.msra.mxu0 0.0
    %782 = vmatprep.subr.mxu0 0.0
    %783 = vmatpush1.msra.mxu0 0.0
    %784 = vmatprep.subr.mxu0 0.0
    %785 = vmatpush1.msra.mxu0 0.0
    %786 = vmatprep.subr.mxu0 0.0
    %787 = vmatpush1.msra.mxu0 0.0
    %788 = vmatprep.subr.mxu0 0.0
    %789 = vmatpush1.msra.mxu0 0.0
    %790 = vmatprep.subr.mxu0 0.0
    %791 = vmatpush1.msra.mxu0 0.0
    %792 = vmatprep.subr.mxu0 0.0
    %793 = vmatpush1.msra.mxu0 0.0
    %794 = vmatprep.subr.mxu0 0.0
    %795 = vmatpush1.msra.mxu0 0.0
    %796 = vmatprep.subr.mxu0 0.0
    %797 = vmatpush1.msra.mxu0 0.0
    %798 = vmatprep.subr.mxu0 0.0
    %799 = vmatpush1.msra.mxu0 0.0
    %800 = vmatprep.subr.mxu0 0.0
    %801 = vmatpush1.msra.mxu0 0.0
    %802 = vmatprep.subr.mxu0 0.0
    %803 = vmatpush1.msra.mxu0 0.0
    %804 = vmatprep.subr.mxu0 0.0
    %805 = vmatpush1.msra.mxu0 0.0
    %806 = vmatprep.subr.mxu0 0.0
    %807 = vmatpush1.msra.mxu0 0.0
    %808 = vmatprep.subr.mxu0 0.0
    %809 = vmatpush1.msra.mxu0 0.0
    %810 = vmatprep.subr.mxu0 0.0
    %811 = vmatpush1.msra.mxu0 0.0
    %812 = vmatprep.subr.mxu0 0.0
    %813 = vmatpush1.msra.mxu0 0.0
    %814 = vmatprep.subr.mxu0 0.0
    %815 = vmatpush1.msra.mxu0 0.0
    %816 = vmatprep.subr.mxu0 0.0
    %817 = vmatpush1.msra.mxu0 0.0
    %818 = vmatprep.subr.mxu0 0.0
    %819 = vmatpush1.msra.mxu0 0.0
    %820 = vmatprep.subr.mxu0 0.0
    %821 = vmatpush1.msra.mxu0 0.0
    %822 = vmatprep.subr.mxu0 0.0
    %823 = vmatpush1.msra.mxu0 0.0
    %824 = vmatprep.subr.mxu0 0.0
    %825 = vmatpush1.msra.mxu0 0.0
    %826 = vmatprep.subr.mxu0 0.0
    %827 = vmatpush1.msra.mxu0 0.0
    %828 = vmatprep.subr.mxu0 0.0
    %829 = vmatpush1.msra.mxu0 0.0
    %830 = vmatprep.subr.mxu0 0.0
    %831 = vmatpush1.msra.mxu0 0.0
    %832 = vmatprep.subr.mxu0 0.0
    %833 = vmatpush1.msra.mxu0 0.0
    %834 = vmatprep.subr.mxu0 0.0
    %835 = vmatpush1.msra.mxu0 0.0
    %836 = vmatprep.subr.mxu0 0.0
    %837 = vmatpush1.msra.mxu0 0.0
    %838 = vmatprep.mubr.f32.mxu0 0.0
    %v839 = vand.u32 %v68, 4294901760
    %v840 = vsub.f32 %v68, %v839
    %v841 = vand.u32 %v840, 4294901760
    %842 = vmatmul.mubr.f32.gmra.mrb[0].mxu0 %v841
    %v843 = vpop.f32.mrb[0].mxu0
    %v844 = vadd.f32 %v768, %v843
    %v845 = vpop.f32.mrb[0].mxu0
    %v846 = vadd.f32 %v770, %v845
    %847 = vdwg.mxu0
    %v848 = vand.u32 %v43, 4294901760
    %v849 = vsub.f32 %v43, %v848
    %v850 = vand.u32 %v849, 4294901760
    %851 = vmatprep.subr.mxu0 %v850
    %v852 = vand.u32 %v42, 4294901760
    %v853 = vsub.f32 %v42, %v852
    %v854 = vand.u32 %v853, 4294901760
    %855 = vmatpush1.msra.mxu0 %v854
    %856 = vmatprep.subr.mxu0 0.0
    %857 = vmatpush1.msra.mxu0 0.0
    %858 = vmatprep.subr.mxu0 0.0
    %859 = vmatpush1.msra.mxu0 0.0
    %860 = vmatprep.subr.mxu0 0.0
    %861 = vmatpush1.msra.mxu0 0.0
    %862 = vmatprep.subr.mxu0 0.0
    %863 = vmatpush1.msra.mxu0 0.0
    %864 = vmatprep.subr.mxu0 0.0
    %865 = vmatpush1.msra.mxu0 0.0
    %866 = vmatprep.subr.mxu0 0.0
    %867 = vmatpush1.msra.mxu0 0.0
    %868 = vmatprep.subr.mxu0 0.0
    %869 = vmatpush1.msra.mxu0 0.0
    %870 = vmatprep.subr.mxu0 0.0
    %871 = vmatpush1.msra.mxu0 0.0
    %872 = vmatprep.subr.mxu0 0.0
    %873 = vmatpush1.msra.mxu0 0.0
    %874 = vmatprep.subr.mxu0 0.0
    %875 = vmatpush1.msra.mxu0 0.0
    %876 = vmatprep.subr.mxu0 0.0
    %877 = vmatpush1.msra.mxu0 0.0
    %878 = vmatprep.subr.mxu0 0.0
    %879 = vmatpush1.msra.mxu0 0.0
    %880 = vmatprep.subr.mxu0 0.0
    %881 = vmatpush1.msra.mxu0 0.0
    %882 = vmatprep.subr.mxu0 0.0
    %883 = vmatpush1.msra.mxu0 0.0
    %884 = vmatprep.subr.mxu0 0.0
    %885 = vmatpush1.msra.mxu0 0.0
    %886 = vmatprep.subr.mxu0 0.0
    %887 = vmatpush1.msra.mxu0 0.0
    %888 = vmatprep.subr.mxu0 0.0
    %889 = vmatpush1.msra.mxu0 0.0
    %890 = vmatprep.subr.mxu0 0.0
    %891 = vmatpush1.msra.mxu0 0.0
    %892 = vmatprep.subr.mxu0 0.0
    %893 = vmatpush1.msra.mxu0 0.0
    %894 = vmatprep.subr.mxu0 0.0
    %895 = vmatpush1.msra.mxu0 0.0
    %896 = vmatprep.subr.mxu0 0.0
    %897 = vmatpush1.msra.mxu0 0.0
    %898 = vmatprep.subr.mxu0 0.0
    %899 = vmatpush1.msra.mxu0 0.0
    %900 = vmatprep.subr.mxu0 0.0
    %901 = vmatpush1.msra.mxu0 0.0
    %902 = vmatprep.subr.mxu0 0.0
    %903 = vmatpush1.msra.mxu0 0.0
    %904 = vmatprep.subr.mxu0 0.0
    %905 = vmatpush1.msra.mxu0 0.0
    %906 = vmatprep.subr.mxu0 0.0
    %907 = vmatpush1.msra.mxu0 0.0
    %908 = vmatprep.subr.mxu0 0.0
    %909 = vmatpush1.msra.mxu0 0.0
    %910 = vmatprep.subr.mxu0 0.0
    %911 = vmatpush1.msra.mxu0 0.0
    %912 = vmatprep.subr.mxu0 0.0
    %913 = vmatpush1.msra.mxu0 0.0
    %914 = vmatprep.subr.mxu0 0.0
    %915 = vmatpush1.msra.mxu0 0.0
    %916 = vmatprep.subr.mxu0 0.0
    %917 = vmatpush1.msra.mxu0 0.0
    %918 = vmatprep.mubr.f32.mxu0 0.0
    %v919 = vand.u32 %v68, 4294901760
    %920 = vmatmul.mubr.f32.gmra.mrb[0].mxu0 %v919
    %v921 = vpop.f32.mrb[0].mxu0
    %v922 = vadd.f32 %v844, %v921
    %v923 = vpop.f32.mrb[0].mxu0
    %v924 = vadd.f32 %v846, %v923
    %925 = vdwg.mxu0
    %v926 = vand.u32 %v43, 4294901760
    %927 = vmatprep.subr.mxu0 %v926
    %v928 = vand.u32 %v42, 4294901760
    %929 = vmatpush1.msra.mxu0 %v928
    %930 = vmatprep.subr.mxu0 0.0
    %931 = vmatpush1.msra.mxu0 0.0
    %932 = vmatprep.subr.mxu0 0.0
    %933 = vmatpush1.msra.mxu0 0.0
    %934 = vmatprep.subr.mxu0 0.0
    %935 = vmatpush1.msra.mxu0 0.0
    %936 = vmatprep.subr.mxu0 0.0
    %937 = vmatpush1.msra.mxu0 0.0
    %938 = vmatprep.subr.mxu0 0.0
    %939 = vmatpush1.msra.mxu0 0.0
    %940 = vmatprep.subr.mxu0 0.0
    %941 = vmatpush1.msra.mxu0 0.0
    %942 = vmatprep.subr.mxu0 0.0
    %943 = vmatpush1.msra.mxu0 0.0
    %944 = vmatprep.subr.mxu0 0.0
    %945 = vmatpush1.msra.mxu0 0.0
    %946 = vmatprep.subr.mxu0 0.0
    %947 = vmatpush1.msra.mxu0 0.0
    %948 = vmatprep.subr.mxu0 0.0
    %949 = vmatpush1.msra.mxu0 0.0
    %950 = vmatprep.subr.mxu0 0.0
    %951 = vmatpush1.msra.mxu0 0.0
    %952 = vmatprep.subr.mxu0 0.0
    %953 = vmatpush1.msra.mxu0 0.0
    %954 = vmatprep.subr.mxu0 0.0
    %955 = vmatpush1.msra.mxu0 0.0
    %956 = vmatprep.subr.mxu0 0.0
    %957 = vmatpush1.msra.mxu0 0.0
    %958 = vmatprep.subr.mxu0 0.0
    %959 = vmatpush1.msra.mxu0 0.0
    %960 = vmatprep.subr.mxu0 0.0
    %961 = vmatpush1.msra.mxu0 0.0
    %962 = vmatprep.subr.mxu0 0.0
    %963 = vmatpush1.msra.mxu0 0.0
    %964 = vmatprep.subr.mxu0 0.0
    %965 = vmatpush1.msra.mxu0 0.0
    %966 = vmatprep.subr.mxu0 0.0
    %967 = vmatpush1.msra.mxu0 0.0
    %968 = vmatprep.subr.mxu0 0.0
    %969 = vmatpush1.msra.mxu0 0.0
    %970 = vmatprep.subr.mxu0 0.0
    %971 = vmatpush1.msra.mxu0 0.0
    %972 = vmatprep.subr.mxu0 0.0
    %973 = vmatpush1.msra.mxu0 0.0
    %974 = vmatprep.subr.mxu0 0.0
    %975 = vmatpush1.msra.mxu0 0.0
    %976 = vmatprep.subr.mxu0 0.0
    %977 = vmatpush1.msra.mxu0 0.0
    %978 = vmatprep.subr.mxu0 0.0
    %979 = vmatpush1.msra.mxu0 0.0
    %980 = vmatprep.subr.mxu0 0.0
    %981 = vmatpush1.msra.mxu0 0.0
    %982 = vmatprep.subr.mxu0 0.0
    %983 = vmatpush1.msra.mxu0 0.0
    %984 = vmatprep.subr.mxu0 0.0
    %985 = vmatpush1.msra.mxu0 0.0
    %986 = vmatprep.subr.mxu0 0.0
    %987 = vmatpush1.msra.mxu0 0.0
    %988 = vmatprep.subr.mxu0 0.0
    %989 = vmatpush1.msra.mxu0 0.0
    %990 = vmatprep.subr.mxu0 0.0
    %991 = vmatpush1.msra.mxu0 0.0
    %992 = vmatprep.mubr.f32.mxu0 0.0
    %v993 = vand.u32 %v68, 4294901760
    %994 = vmatmul.mubr.f32.gmra.mrb[0].mxu0 %v993
    %v995 = vpop.f32.mrb[0].mxu0
    %v996 = vadd.f32 %v922, %v995
    %v997 = vpop.f32.mrb[0].mxu0
    %v998 = vadd.f32 %v924, %v997
    %999 = vdwg.mxu0
    %v1000 = vand.u32 2147483647, %v531
    %vm1001 = vcmp.le.f32.partialorder %v1000, 0.7853982
    %vm1002 = vcmp.lt.s32.totalorder %v531, 0
    %v1003 = vand.u32 %v531, 2139095040
    %v1004 = vshrl.u32 %v1003, 23
    %v1005 = vsub.s32 %v1004, 127
    %v1006 = vand.u32 2147483647, %v531
    %v1007 = vand.u32 %v1006, 8388607
    %v1008 = vor.u32 %v1007, 8388608
    %v1009 = vsub.s32 0, %v1008
    %v1010 = vadd.s32 %v1005, 1
    %vm1011 = vcmp.gt.s32.totalorder %v1010, 0
    %v1012 = vsel %vm1011, %v1010, 0
    %v1013 = vshrl.u32 %v1012, 5
    %v1014 = vand.u32 %v1012, 31
    %v1015 = vsub.s32 32, %v1014
    %v1016 = vshrl.u32 683565275, %v1015
    %v1017 = vshll.u32 683565275, %v1014
    %v1018 = vshrl.u32 2475754826, %v1015
    %v1019 = vor.u32 %v1017, %v1018
    %v1020 = vshll.u32 2475754826, %v1014
    %v1021 = vshrl.u32 2131351028, %v1015
    %v1022 = vor.u32 %v1020, %v1021
    %v1023 = vshll.u32 2131351028, %v1014
    %v1024 = vshrl.u32 2102212464, %v1015
    %v1025 = vor.u32 %v1023, %v1024
    %v1026 = vshll.u32 2102212464, %v1014
    %v1027 = vshrl.u32 920167782, %v1015
    %v1028 = vor.u32 %v1026, %v1027
    %v1029 = vshll.u32 920167782, %v1014
    %v1030 = vshrl.u32 1326507024, %v1015
    %v1031 = vor.u32 %v1029, %v1030
    %vm1032 = vcmp.lt.s32.totalorder %v1013, 1
    %vm1033 = vcmp.lt.s32.totalorder %v1013, 2
    %vm1034 = vcmp.lt.s32.totalorder %v1013, 3
    %vm1035 = vcmp.lt.s32.totalorder %v1013, 4
    %v1036 = vsel %vm1032, %v1016, %v1019
    %v1037 = vsel %vm1035, %v1025, 2102212464
    %v1038 = vsel %vm1034, %v1022, %v1037
    %v1039 = vsel %vm1033, %v1036, %v1038
    %v1040 = vsel %vm1032, %v1019, %v1022
    %v1041 = vsel %vm1035, %v1028, 920167782
    %v1042 = vsel %vm1034, %v1025, %v1041
    %v1043 = vsel %vm1033, %v1040, %v1042
    %v1044 = vsel %vm1032, %v1022, %v1025
    %v1045 = vsel %vm1035, %v1031, 1326507024
    %v1046 = vsel %vm1034, %v1028, %v1045
    %v1047 = vsel %vm1033, %v1044, %v1046
    %v1048 = vshll.u32 %v1008, 8
    %v1049 = vmul.u32.u64.compose %v1048, %v1047
    %v1050 = vextract.low.u32 %v1049
    %v1051 = vextract.high.u32 %v1049
    %v1052 = vmul.u32.u64.compose %v1048, %v1043
    %v1053 = vextract.low.u32 %v1052
    %v1054 = vextract.high.u32 %v1052
    %v1055 = vmul.u32 %v1048, %v1039
    %v1056 = vadd.s32 %v1051, %v1053
    %vm1057 = vc.u32 %v1051, %v1053
    %v1058 = vadd.s32 %v1054, 1
    %v1059 = vsel %vm1057, %v1058, %v1054
    %v1060 = vadd.s32 %v1055, %v1059
    %v1061 = vadd.s32 %v1060, 536870912
    %v1062 = vshrl.u32 %v1061, 30
    %v1063 = vshll.u32 %v1062, 30
    %v1064 = vsub.s32 %v1060, %v1063
    %vm1065 = vcmp.lt.s32.totalorder %v1064, 0
    %v1066 = vsub.s32 0, %v1064
    %v1067 = vsel %vm1065, %v1066, %v1064
    %v1068 = vclz %v1067
    %v1069 = vsub.s32 %v1068, 2
    %vm1070 = vcmp.gt.s32.totalorder 0, %v1069
    %v1071 = vsel %vm1070, 0, %v1069
    %v1072 = vsub.s32 32, %v1071
    %v1073 = vshll.u32 %v1064, %v1071
    %v1074 = vshrl.u32 %v1056, %v1072
    %v1075 = vor.u32 %v1073, %v1074
    %v1076 = vsub.s32 4294967266, %v1071
    %v1077 = vadd.s32 %v1076, 127
    %v1078 = vshll.u32 %v1077, 23
    %v1079 = vor.u32 4788187, %v1078
    %v1080 = vand.u32 2147483647, %v1079
    %v1082 = vcvt.s32.f32 %v1075
    %v1083 = vmul.f32 %v1082, %v1080
    %v1084 = vxor.u32 %v1083, 2147483648
    %v1085 = vsel %vm1002, %v1084, %v1083
    %v1086 = vsub.s32 4, %v1062
    %v1087 = vsel %vm1002, %v1086, %v1062
    %v1088 = vsel %vm1001, %v531, %v1085
    %v1089 = vsel %vm1001, 0, %v1087
    %v1090 = vcosq.f32.pop %v1088
    %v1091 = vsinq.f32.pop %v1088
    %vm1092 = vweird.f32 %v531
    %v1093 = vadd.s32 %v1089, 3
    %v1094 = vand.u32 %v1093, 3
    %vm1095 = vcmp.lt.s32.totalorder %v1094, 2
    %vm1096 = vcmp.eq.s32.totalorder %v1094, 0
    %v1097 = vxor.u32 %v1091, 2147483648
    %v1098 = vsel %vm1096, %v1090, %v1097
    %vm1099 = vcmp.eq.s32.totalorder %v1094, 2
    %v1100 = vxor.u32 %v1090, 2147483648
    %v1101 = vsel %vm1099, %v1100, %v1091
    %v1102 = vsel %vm1095, %v1098, %v1101
    %v1103 = vsel %vm1092, nan, %v1102
    %v1104 = vand.u32 2147483647, %v533
    %vm1105 = vcmp.le.f32.partialorder %v1104, 0.7853982
    %vm1106 = vcmp.lt.s32.totalorder %v533, 0
    %v1107 = vand.u32 %v533, 2139095040
    %v1108 = vshrl.u32 %v1107, 23
    %v1109 = vsub.s32 %v1108, 127
    %v1110 = vand.u32 2147483647, %v533
    %v1111 = vand.u32 %v1110, 8388607
    %v1112 = vor.u32 %v1111, 8388608
    %v1113 = vsub.s32 0, %v1112
    %v1114 = vadd.s32 %v1109, 1
    %vm1115 = vcmp.gt.s32.totalorder %v1114, 0
    %v1116 = vsel %vm1115, %v1114, 0
    %v1117 = vshrl.u32 %v1116, 5
    %v1118 = vand.u32 %v1116, 31
    %v1119 = vsub.s32 32, %v1118
    %v1120 = vshrl.u32 683565275, %v1119
    %v1121 = vshll.u32 683565275, %v1118
    %v1122 = vshrl.u32 2475754826, %v1119
    %v1123 = vor.u32 %v1121, %v1122
    %v1124 = vshll.u32 2475754826, %v1118
    %v1125 = vshrl.u32 2131351028, %v1119
    %v1126 = vor.u32 %v1124, %v1125
    %v1127 = vshll.u32 2131351028, %v1118
    %v1128 = vshrl.u32 2102212464, %v1119
    %v1129 = vor.u32 %v1127, %v1128
    %v1130 = vshll.u32 2102212464, %v1118
    %v1131 = vshrl.u32 920167782, %v1119
    %v1132 = vor.u32 %v1130, %v1131
    %v1133 = vshll.u32 920167782, %v1118
    %v1134 = vshrl.u32 1326507024, %v1119
    %v1135 = vor.u32 %v1133, %v1134
    %vm1136 = vcmp.lt.s32.totalorder %v1117, 1
    %vm1137 = vcmp.lt.s32.totalorder %v1117, 2
    %vm1138 = vcmp.lt.s32.totalorder %v1117, 3
    %vm1139 = vcmp.lt.s32.totalorder %v1117, 4
    %v1140 = vsel %vm1136, %v1120, %v1123
    %v1141 = vsel %vm1139, %v1129, 2102212464
    %v1142 = vsel %vm1138, %v1126, %v1141
    %v1143 = vsel %vm1137, %v1140, %v1142
    %v1144 = vsel %vm1136, %v1123, %v1126
    %v1145 = vsel %vm1139, %v1132, 920167782
    %v1146 = vsel %vm1138, %v1129, %v1145
    %v1147 = vsel %vm1137, %v1144, %v1146
    %v1148 = vsel %vm1136, %v1126, %v1129
    %v1149 = vsel %vm1139, %v1135, 1326507024
    %v1150 = vsel %vm1138, %v1132, %v1149
    %v1151 = vsel %vm1137, %v1148, %v1150
    %v1152 = vshll.u32 %v1112, 8
    %v1153 = vmul.u32.u64.compose %v1152, %v1151
    %v1154 = vextract.low.u32 %v1153
    %v1155 = vextract.high.u32 %v1153
    %v1156 = vmul.u32.u64.compose %v1152, %v1147
    %v1157 = vextract.low.u32 %v1156
    %v1158 = vextract.high.u32 %v1156
    %v1159 = vmul.u32 %v1152, %v1143
    %v1160 = vadd.s32 %v1155, %v1157
    %vm1161 = vc.u32 %v1155, %v1157
    %v1162 = vadd.s32 %v1158, 1
    %v1163 = vsel %vm1161, %v1162, %v1158
    %v1164 = vadd.s32 %v1159, %v1163
    %v1165 = vadd.s32 %v1164, 536870912
    %v1166 = vshrl.u32 %v1165, 30
    %v1167 = vshll.u32 %v1166, 30
    %v1168 = vsub.s32 %v1164, %v1167
    %vm1169 = vcmp.lt.s32.totalorder %v1168, 0
    %v1170 = vsub.s32 0, %v1168
    %v1171 = vsel %vm1169, %v1170, %v1168
    %v1172 = vclz %v1171
    %v1173 = vsub.s32 %v1172, 2
    %vm1174 = vcmp.gt.s32.totalorder 0, %v1173
    %v1175 = vsel %vm1174, 0, %v1173
    %v1176 = vsub.s32 32, %v1175
    %v1177 = vshll.u32 %v1168, %v1175
    %v1178 = vshrl.u32 %v1160, %v1176
    %v1179 = vor.u32 %v1177, %v1178
    %v1180 = vsub.s32 4294967266, %v1175
    %v1181 = vadd.s32 %v1180, 127
    %v1182 = vshll.u32 %v1181, 23
    %v1183 = vor.u32 4788187, %v1182
    %v1184 = vand.u32 2147483647, %v1183
    %v1186 = vcvt.s32.f32 %v1179
    %v1187 = vmul.f32 %v1186, %v1184
    %v1188 = vxor.u32 %v1187, 2147483648
    %v1189 = vsel %vm1106, %v1188, %v1187
    %v1190 = vsub.s32 4, %v1166
    %v1191 = vsel %vm1106, %v1190, %v1166
    %v1192 = vsel %vm1105, %v533, %v1189
    %v1193 = vsel %vm1105, 0, %v1191
    %v1194 = vcosq.f32.pop %v1192
    %v1195 = vsinq.f32.pop %v1192
    %vm1196 = vweird.f32 %v533
    %v1197 = vadd.s32 %v1193, 3
    %v1198 = vand.u32 %v1197, 3
    %vm1199 = vcmp.lt.s32.totalorder %v1198, 2
    %vm1200 = vcmp.eq.s32.totalorder %v1198, 0
    %v1201 = vxor.u32 %v1195, 2147483648
    %v1202 = vsel %vm1200, %v1194, %v1201
    %vm1203 = vcmp.eq.s32.totalorder %v1198, 2
    %v1204 = vxor.u32 %v1194, 2147483648
    %v1205 = vsel %vm1203, %v1204, %v1195
    %v1206 = vsel %vm1199, %v1202, %v1205
    %v1207 = vsel %vm1196, nan, %v1206
    %v1208 = vand.u32 2147483647, %v996
    %vm1209 = vcmp.le.f32.partialorder %v1208, 0.7853982
    %vm1210 = vcmp.lt.s32.totalorder %v996, 0
    %v1211 = vand.u32 %v996, 2139095040
    %v1212 = vshrl.u32 %v1211, 23
    %v1213 = vsub.s32 %v1212, 127
    %v1214 = vand.u32 2147483647, %v996
    %v1215 = vand.u32 %v1214, 8388607
    %v1216 = vor.u32 %v1215, 8388608
    %v1217 = vsub.s32 0, %v1216
    %v1218 = vadd.s32 %v1213, 1
    %vm1219 = vcmp.gt.s32.totalorder %v1218, 0
    %v1220 = vsel %vm1219, %v1218, 0
    %v1221 = vshrl.u32 %v1220, 5
    %v1222 = vand.u32 %v1220, 31
    %v1223 = vsub.s32 32, %v1222
    %v1224 = vshrl.u32 683565275, %v1223
    %v1225 = vshll.u32 683565275, %v1222
    %v1226 = vshrl.u32 2475754826, %v1223
    %v1227 = vor.u32 %v1225, %v1226
    %v1228 = vshll.u32 2475754826, %v1222
    %v1229 = vshrl.u32 2131351028, %v1223
    %v1230 = vor.u32 %v1228, %v1229
    %v1231 = vshll.u32 2131351028, %v1222
    %v1232 = vshrl.u32 2102212464, %v1223
    %v1233 = vor.u32 %v1231, %v1232
    %v1234 = vshll.u32 2102212464, %v1222
    %v1235 = vshrl.u32 920167782, %v1223
    %v1236 = vor.u32 %v1234, %v1235
    %v1237 = vshll.u32 920167782, %v1222
    %v1238 = vshrl.u32 1326507024, %v1223
    %v1239 = vor.u32 %v1237, %v1238
    %vm1240 = vcmp.lt.s32.totalorder %v1221, 1
    %vm1241 = vcmp.lt.s32.totalorder %v1221, 2
    %vm1242 = vcmp.lt.s32.totalorder %v1221, 3
    %vm1243 = vcmp.lt.s32.totalorder %v1221, 4
    %v1244 = vsel %vm1240, %v1224, %v1227
    %v1245 = vsel %vm1243, %v1233, 2102212464
    %v1246 = vsel %vm1242, %v1230, %v1245
    %v1247 = vsel %vm1241, %v1244, %v1246
    %v1248 = vsel %vm1240, %v1227, %v1230
    %v1249 = vsel %vm1243, %v1236, 920167782
    %v1250 = vsel %vm1242, %v1233, %v1249
    %v1251 = vsel %vm1241, %v1248, %v1250
    %v1252 = vsel %vm1240, %v1230, %v1233
    %v1253 = vsel %vm1243, %v1239, 1326507024
    %v1254 = vsel %vm1242, %v1236, %v1253
    %v1255 = vsel %vm1241, %v1252, %v1254
    %v1256 = vshll.u32 %v1216, 8
    %v1257 = vmul.u32.u64.compose %v1256, %v1255
    %v1258 = vextract.low.u32 %v1257
    %v1259 = vextract.high.u32 %v1257
    %v1260 = vmul.u32.u64.compose %v1256, %v1251
    %v1261 = vextract.low.u32 %v1260
    %v1262 = vextract.high.u32 %v1260
    %v1263 = vmul.u32 %v1256, %v1247
    %v1264 = vadd.s32 %v1259, %v1261
    %vm1265 = vc.u32 %v1259, %v1261
    %v1266 = vadd.s32 %v1262, 1
    %v1267 = vsel %vm1265, %v1266, %v1262
    %v1268 = vadd.s32 %v1263, %v1267
    %v1269 = vadd.s32 %v1268, 536870912
    %v1270 = vshrl.u32 %v1269, 30
    %v1271 = vshll.u32 %v1270, 30
    %v1272 = vsub.s32 %v1268, %v1271
    %vm1273 = vcmp.lt.s32.totalorder %v1272, 0
    %v1274 = vsub.s32 0, %v1272
    %v1275 = vsel %vm1273, %v1274, %v1272
    %v1276 = vclz %v1275
    %v1277 = vsub.s32 %v1276, 2
    %vm1278 = vcmp.gt.s32.totalorder 0, %v1277
    %v1279 = vsel %vm1278, 0, %v1277
    %v1280 = vsub.s32 32, %v1279
    %v1281 = vshll.u32 %v1272, %v1279
    %v1282 = vshrl.u32 %v1264, %v1280
    %v1283 = vor.u32 %v1281, %v1282
    %v1284 = vsub.s32 4294967266, %v1279
    %v1285 = vadd.s32 %v1284, 127
    %v1286 = vshll.u32 %v1285, 23
    %v1287 = vor.u32 4788187, %v1286
    %v1288 = vand.u32 2147483647, %v1287
    %v1290 = vcvt.s32.f32 %v1283
    %v1291 = vmul.f32 %v1290, %v1288
    %v1292 = vxor.u32 %v1291, 2147483648
    %v1293 = vsel %vm1210, %v1292, %v1291
    %v1294 = vsub.s32 4, %v1270
    %v1295 = vsel %vm1210, %v1294, %v1270
    %v1296 = vsel %vm1209, %v996, %v1293
    %v1297 = vsel %vm1209, 0, %v1295
    %v1298 = vcosq.f32.pop %v1296
    %v1299 = vsinq.f32.pop %v1296
    %vm1300 = vweird.f32 %v996
    %v1301 = vadd.s32 %v1297, 3
    %v1302 = vand.u32 %v1301, 3
    %vm1303 = vcmp.lt.s32.totalorder %v1302, 2
    %vm1304 = vcmp.eq.s32.totalorder %v1302, 0
    %v1305 = vxor.u32 %v1299, 2147483648
    %v1306 = vsel %vm1304, %v1298, %v1305
    %vm1307 = vcmp.eq.s32.totalorder %v1302, 2
    %v1308 = vxor.u32 %v1298, 2147483648
    %v1309 = vsel %vm1307, %v1308, %v1299
    %v1310 = vsel %vm1303, %v1306, %v1309
    %v1311 = vsel %vm1300, nan, %v1310
    %v1312 = vand.u32 2147483647, %v998
    %vm1313 = vcmp.le.f32.partialorder %v1312, 0.7853982
    %vm1314 = vcmp.lt.s32.totalorder %v998, 0
    %v1315 = vand.u32 %v998, 2139095040
    %v1316 = vshrl.u32 %v1315, 23
    %v1317 = vsub.s32 %v1316, 127
    %v1318 = vand.u32 2147483647, %v998
    %v1319 = vand.u32 %v1318, 8388607
    %v1320 = vor.u32 %v1319, 8388608
    %v1321 = vsub.s32 0, %v1320
    %v1322 = vadd.s32 %v1317, 1
    %vm1323 = vcmp.gt.s32.totalorder %v1322, 0
    %v1324 = vsel %vm1323, %v1322, 0
    %v1325 = vshrl.u32 %v1324, 5
    %v1326 = vand.u32 %v1324, 31
    %v1327 = vsub.s32 32, %v1326
    %v1328 = vshrl.u32 683565275, %v1327
    %v1329 = vshll.u32 683565275, %v1326
    %v1330 = vshrl.u32 2475754826, %v1327
    %v1331 = vor.u32 %v1329, %v1330
    %v1332 = vshll.u32 2475754826, %v1326
    %v1333 = vshrl.u32 2131351028, %v1327
    %v1334 = vor.u32 %v1332, %v1333
    %v1335 = vshll.u32 2131351028, %v1326
    %v1336 = vshrl.u32 2102212464, %v1327
    %v1337 = vor.u32 %v1335, %v1336
    %v1338 = vshll.u32 2102212464, %v1326
    %v1339 = vshrl.u32 920167782, %v1327
    %v1340 = vor.u32 %v1338, %v1339
    %v1341 = vshll.u32 920167782, %v1326
    %v1342 = vshrl.u32 1326507024, %v1327
    %v1343 = vor.u32 %v1341, %v1342
    %vm1344 = vcmp.lt.s32.totalorder %v1325, 1
    %vm1345 = vcmp.lt.s32.totalorder %v1325, 2
    %vm1346 = vcmp.lt.s32.totalorder %v1325, 3
    %vm1347 = vcmp.lt.s32.totalorder %v1325, 4
    %v1348 = vsel %vm1344, %v1328, %v1331
    %v1349 = vsel %vm1347, %v1337, 2102212464
    %v1350 = vsel %vm1346, %v1334, %v1349
    %v1351 = vsel %vm1345, %v1348, %v1350
    %v1352 = vsel %vm1344, %v1331, %v1334
    %v1353 = vsel %vm1347, %v1340, 920167782
    %v1354 = vsel %vm1346, %v1337, %v1353
    %v1355 = vsel %vm1345, %v1352, %v1354
    %v1356 = vsel %vm1344, %v1334, %v1337
    %v1357 = vsel %vm1347, %v1343, 1326507024
    %v1358 = vsel %vm1346, %v1340, %v1357
    %v1359 = vsel %vm1345, %v1356, %v1358
    %v1360 = vshll.u32 %v1320, 8
    %v1361 = vmul.u32.u64.compose %v1360, %v1359
    %v1362 = vextract.low.u32 %v1361
    %v1363 = vextract.high.u32 %v1361
    %v1364 = vmul.u32.u64.compose %v1360, %v1355
    %v1365 = vextract.low.u32 %v1364
    %v1366 = vextract.high.u32 %v1364
    %v1367 = vmul.u32 %v1360, %v1351
    %v1368 = vadd.s32 %v1363, %v1365
    %vm1369 = vc.u32 %v1363, %v1365
    %v1370 = vadd.s32 %v1366, 1
    %v1371 = vsel %vm1369, %v1370, %v1366
    %v1372 = vadd.s32 %v1367, %v1371
    %v1373 = vadd.s32 %v1372, 536870912
    %v1374 = vshrl.u32 %v1373, 30
    %v1375 = vshll.u32 %v1374, 30
    %v1376 = vsub.s32 %v1372, %v1375
    %vm1377 = vcmp.lt.s32.totalorder %v1376, 0
    %v1378 = vsub.s32 0, %v1376
    %v1379 = vsel %vm1377, %v1378, %v1376
    %v1380 = vclz %v1379
    %v1381 = vsub.s32 %v1380, 2
    %vm1382 = vcmp.gt.s32.totalorder 0, %v1381
    %v1383 = vsel %vm1382, 0, %v1381
    %v1384 = vsub.s32 32, %v1383
    %v1385 = vshll.u32 %v1376, %v1383
    %v1386 = vshrl.u32 %v1368, %v1384
    %v1387 = vor.u32 %v1385, %v1386
    %v1388 = vsub.s32 4294967266, %v1383
    %v1389 = vadd.s32 %v1388, 127
    %v1390 = vshll.u32 %v1389, 23
    %v1391 = vor.u32 4788187, %v1390
    %v1392 = vand.u32 2147483647, %v1391
    %v1394 = vcvt.s32.f32 %v1387
    %v1395 = vmul.f32 %v1394, %v1392
    %v1396 = vxor.u32 %v1395, 2147483648
    %v1397 = vsel %vm1314, %v1396, %v1395
    %v1398 = vsub.s32 4, %v1374
    %v1399 = vsel %vm1314, %v1398, %v1374
    %v1400 = vsel %vm1313, %v998, %v1397
    %v1401 = vsel %vm1313, 0, %v1399
    %v1402 = vcosq.f32.pop %v1400
    %v1403 = vsinq.f32.pop %v1400
    %vm1404 = vweird.f32 %v998
    %v1405 = vadd.s32 %v1401, 3
    %v1406 = vand.u32 %v1405, 3
    %vm1407 = vcmp.lt.s32.totalorder %v1406, 2
    %vm1408 = vcmp.eq.s32.totalorder %v1406, 0
    %v1409 = vxor.u32 %v1403, 2147483648
    %v1410 = vsel %vm1408, %v1402, %v1409
    %vm1411 = vcmp.eq.s32.totalorder %v1406, 2
    %v1412 = vxor.u32 %v1402, 2147483648
    %v1413 = vsel %vm1411, %v1412, %v1403
    %v1414 = vsel %vm1407, %v1410, %v1413
    %v1415 = vsel %vm1404, nan, %v1414
    %1416 = vst [vmem:[#allocation7] sm:$0xff] %v1103
    %1417 = vst [vmem:[#allocation7 + $0x8] sm:$0xff] %v1207
    %1418 = vst [vmem:[#allocation7 + $0x10] sm:$0xff] %v1311
    %1419 = vst [vmem:[#allocation7 + $0x18] sm:$0xff] %v1415
    // Predicated region
    $region22: #{tpu_custom_call.1} parent=1 // pred_check
      _
    $region23: #{tpu_custom_call.1} parent=1 // pred_check_branch
      %1421 = sbr.rel (0) target = $region25
    $region24: #{tpu_custom_call.1} parent=1 // pred_region
      %s1423 = ssub.s32 512, 512
      %1424 = vsyncadd [#allocation4], %s1423
      %s1426 = sshll.u32 [#allocation7], 4
      %s1427 = int_to_ptr.vmem [resolvable:$true] %s1426
      %1429 = dma.vmem_to_hbm [thread:$0]  %s1427, 512, %s3, [#allocation4]
    $region25: #{tpu_custom_call.1} parent=1 // pred_fallthru
      _
    // Predicated region
    $region26: #{tpu_custom_call.1} parent=1 // pred_check
      _
    $region27: #{tpu_custom_call.1} parent=1 // pred_check_branch
      %1431 = sbr.rel (0) target = $region29
    $region28: #{tpu_custom_call.1} parent=1 // pred_region
      %1432 = dma.done [#allocation4], 512
    $region29: #{tpu_custom_call.1} parent=1 // pred_fallthru
      _
    %1433 = vsyncpa [#allocation3], 1
    %1434 = vsyncpa [#allocation6], 1
    %1435 = vsyncpa [#allocation4], 1

</llo_original>
